<compile_context>
chip_gen: v6e
topology: v6e:2x2x1
jax: 0.10.0
libtpu: 0.0.40
codegen_flags: <defaults>
</compile_context>

<pallas_src>
import functools

import jax
import jax.numpy as jnp
from jax.experimental import pallas as pl
from jax.experimental.pallas import tpu as pltpu


# ----------------------------------------------------------------------------- kernel

def _fsmn_kernel(xc_ref, xh_ref, w_ref, o_ref, *, TT, K, Dp, Op, fuse_taps):
    """One (batch, time-tile) grid step.

    xc_ref : [1, TT, Dp]    bf16  padded-x rows [i*TT, (i+1)*TT)
    xh_ref : [1, HALO, Dp]  bf16  padded-x rows [(i+1)*TT, (i+1)*TT + HALO)   (HALO >= K-1)
    w_ref  : [K*Dp, Op]     bf16  tap-major flattened weights (skip identity folded in)
    o_ref  : [1, TT, Op]    f32
    """
    cur = xc_ref[0]                                            # [TT, Dp]
    halo = xh_ref[0]                                           # [HALO, Dp]
    window = jnp.concatenate([cur, halo], axis=0)              # [TT + HALO, Dp]

    if fuse_taps:
        # im2col: row t = [x_pad[t+0], x_pad[t+1], ..., x_pad[t+K-1]] along 128-aligned lane groups.
        # TODO(synk): the K sublane-shifted slices could be built with pltpu.roll (XLU slot).
        cols = [window[k:k + TT, :] for k in range(K)]         # K x [TT, Dp]
        im2col = cols[0] if K == 1 else jnp.concatenate(cols, axis=1)   # [TT, K*Dp]
        acc = jnp.dot(im2col, w_ref[...], preferred_element_type=jnp.float32)   # [TT, Op]
    else:
        # Dp already fills the MXU contraction: K accumulating matmuls, no im2col slab.
        acc = jnp.zeros((TT, Op), jnp.float32)
        for k in range(K):
            acc = acc + jnp.dot(window[k:k + TT, :], w_ref[k * Dp:(k + 1) * Dp, :],
                                preferred_element_type=jnp.float32)

    o_ref[0] = acc.astype(o_ref.dtype)


# ----------------------------------------------------------------------------- wrapper helpers

def _round_up(n, m):
    return -(-n // m) * m


def _pick_halo(k_minus_1):
    """Smallest 'nice' halo depth >= K-1 (divides 128-multiples when <= 128)."""
    for h in (16, 32, 64, 128):
        if k_minus_1 <= h:
            return h
    return _round_up(k_minus_1, 128)


def _vmem_need_bytes(tt, K, Dp, Op, halo, fuse_taps):
    """Rough per-step VMEM footprint (double-buffered pipeline blocks + temporaries)."""
    b = 2 * tt * Dp * 2               # current-x block (bf16)
    b += 2 * halo * Dp * 2            # halo block
    b += 2 * K * Dp * Op * 2          # weights (default pipeline double-buffers them)
    b += 2 * tt * Op * 4              # f32 output block
    b += (tt + halo) * Dp * 2         # window concat temp
    if fuse_taps:
        b += tt * K * Dp * 2          # im2col slab
    b += 2 * tt * Op * 4              # f32 accumulator + slack
    return b


def _pick_time_tile(T, K, Dp, Op, halo, max_time_tile, budget_bytes, fuse_taps):
    cap = min(_round_up(T, 16), _round_up(max(max_time_tile, 16), 16))
    cap = _round_up(max(cap, halo), halo)                      # TT multiple of HALO, >= HALO
    tt = cap
    while tt > halo and _vmem_need_bytes(tt, K, Dp, Op, halo, fuse_taps) > budget_bytes:
        tt -= halo
    return tt


# ----------------------------------------------------------------------------- public entry

def fsmn_conv2d(x, w_l, w_r=None, *, skip_connect=True, max_time_tile=512,
                compute_dtype=jnp.bfloat16, vmem_budget_bytes=40 * 1024 * 1024):
    """Pallas forward of the module.

    x:   [B, T, D]        float32 (the module's `input` layout)
    w_l: [O, D, lorder]   = nn.Conv2d(input_dim, output_dim, [lorder, 1]).weight[..., 0]
    w_r: [O, D, rorder]   or None
    Only groups=1 / bias=False (the module defaults) are implemented.
    """
    B, T, D = x.shape
    O, Din, L = w_l.shape
    assert Din == D
    R = 0 if w_r is None else int(w_r.shape[2])
    K = L + R
    if skip_connect:
        assert O == D, "skip connection requires output_dim == input_dim"

    Dp = _round_up(D, 128)                 # lane-aligned channel dims
    Op = _round_up(O, 128)
    HALO = _pick_halo(max(K - 1, 1))
    fuse_taps = (K > 1) and (Dp < 256)     # fuse taps only when the contraction would be shallow

    TT = _pick_time_tile(T, K, Dp, Op, HALO, max_time_tile, vmem_budget_bytes, fuse_taps)
    NT = -(-T // TT)
    Tt = NT * TT                           # padded output length (multiple of TT)

    # One fused pad + bf16 cast pass: left pad L-1 (causal), right pad so the last tile's halo
    # block exists (>= R is implied since HALO >= K-1), lanes padded to Dp.
    left = L - 1
    right = Tt + HALO - left - T
    xpad = jnp.pad(x, ((0, 0), (left, right), (0, Dp - D))).astype(compute_dtype)

    # Tap-major weights [K*Dp, Op]: rows [k*Dp, k*Dp+D) map x_pad[t+k] -> out[t].
    #   taps [0, L)   : causal conv
    #   taps [L, L+R) : right-context conv (shifted by +1 as in the PyTorch forward)
    #   tap  L-1      : + identity when skip_connect (residual becomes bf16-quantized).
    w_taps = jnp.zeros((K, Dp, Op), jnp.float32)
    w_taps = w_taps.at[:L, :D, :O].set(jnp.transpose(w_l, (2, 1, 0)).astype(jnp.float32))
    if R:
        w_taps = w_taps.at[L:, :D, :O].set(jnp.transpose(w_r, (2, 1, 0)).astype(jnp.float32))
    if skip_connect:
        w_taps = w_taps.at[L - 1, :D, :O].add(jnp.eye(D, dtype=jnp.float32))
    wflat = w_taps.reshape(K * Dp, Op).astype(compute_dtype)

    kernel = functools.partial(_fsmn_kernel, TT=TT, K=K, Dp=Dp, Op=Op, fuse_taps=fuse_taps)

    blocks_per_tile = TT // HALO           # TT is a multiple of HALO by construction
    in_specs = [
        pl.BlockSpec((1, TT, Dp), lambda b, i: (b, i, 0)),                            # current tile
        pl.BlockSpec((1, HALO, Dp), lambda b, i: (b, (i + 1) * blocks_per_tile, 0)),  # K-1-row halo
        pl.BlockSpec((K * Dp, Op), lambda b, i: (0, 0)),                              # grid-invariant weights
    ]
    out_spec = pl.BlockSpec((1, TT, Op), lambda b, i: (b, i, 0))

    est = _vmem_need_bytes(TT, K, Dp, Op, HALO, fuse_taps)
    vmem_limit = int(min(max(int(est * 1.3) + (2 << 20), 32 << 20), 96 << 20))

    isz = jnp.dtype(compute_dtype).itemsize
    cost = pl.CostEstimate(
        flops=2 * B * Tt * K * Dp * Op,
        transcendentals=0,
        bytes_accessed=int(B * (Tt + HALO) * Dp * isz          # current blocks
                           + B * NT * HALO * Dp * isz          # halo re-reads
                           + K * Dp * Op * isz                 # weights
                           + B * Tt * Op * 4),                 # output
    )

    out = pl.pallas_call(
        kernel,
        out_shape=jax.ShapeDtypeStruct((B, Tt, Op), x.dtype),
        grid=(B, NT),
        in_specs=in_specs,
        out_specs=out_spec,
        compiler_params=pltpu.CompilerParams(
            dimension_semantics=("parallel", "parallel"),
            vmem_limit_bytes=vmem_limit),
        cost_estimate=cost,
    )(xpad, xpad, wflat)

    if Tt != T or Op != O:
        out = out[:, :T, :O]
    return out


# ----------------------------------------------------------------------------- reference

def ref_forward(x, w_l, w_r=None, skip_connect=True):
    """Pure-JAX f32 reference mirroring the PyTorch forward exactly."""
    B, T, D = x.shape
    O, _, L = w_l.shape
    out = jnp.zeros((B, T, O), jnp.float32)
    xpl = jnp.pad(x, ((0, 0), (L - 1, 0), (0, 0)))
    for k in range(L):
        out = out + jnp.einsum('btd,do->bto', xpl[:, k:k + T, :], w_l[:, :, k].T)
    if w_r is not None:
        R = w_r.shape[2]
        xpr = jnp.pad(x, ((0, 0), (0, R), (0, 0)))[:, 1:, :]
        for k in range(R):
            out = out + jnp.einsum('btd,do->bto', xpr[:, k:k + T, :], w_r[:, :, k].T)
    if skip_connect:
        out = out + x
    return out


# ----------------------------------------------------------------------------- test

if __name__ == "__main__":
    key = jax.random.PRNGKey(0)
    kx, kwl, kwr, kx2, kx3, kwl3 = jax.random.split(key, 6)

    B, T, D = 2, 16, 32                    # input_dim = output_dim = 32
    lorder, rorder = 4, 2

    x = jax.random.normal(kx, (B, T, D), dtype=jnp.float32)
    # nn.Conv2d(input_dim, output_dim, [lorder, 1]) weight -> [O, D, lorder] (trailing 1 squeezed)
    w_l = jax.random.normal(kwl, (D, D, lorder), dtype=jnp.float32) * 0.05
    w_r = jax.random.normal(kwr, (D, D, rorder), dtype=jnp.float32) * 0.05

    # bf16 matmul (skip folded into bf16 weights) vs f32 reference => loosened tolerances.
    TOL = dict(atol=5e-2, rtol=5e-2)

    # Case 1: module defaults (rorder=0, skip_connect=True).
    out1 = fsmn_conv2d(x, w_l, None, skip_connect=True)
    jax.block_until_ready(out1)
    ref1 = ref_forward(x, w_l, None, skip_connect=True)
    assert out1.shape == (B, T, D)
    assert jnp.allclose(out1, ref1, **TOL), float(jnp.max(jnp.abs(out1 - ref1)))

    # Case 2: with right-context branch (rorder=2).
    out2 = fsmn_conv2d(x, w_l, w_r, skip_connect=True)
    jax.block_until_ready(out2)
    ref2 = ref_forward(x, w_l, w_r, skip_connect=True)
    assert jnp.allclose(out2, ref2, **TOL), float(jnp.max(jnp.abs(out2 - ref2)))

    # Case 3: no skip connection (same shapes as case 2; identity-fold disabled).
    out3 = fsmn_conv2d(x, w_l, w_r, skip_connect=False)
    jax.block_until_ready(out3)
    ref3 = ref_forward(x, w_l, w_r, skip_connect=False)
    assert jnp.allclose(out3, ref3, **TOL), float(jnp.max(jnp.abs(out3 - ref3)))

    # Case 4: longer sequence -> multi-tile (B, NT) grid with the small halo blocks.
    T2 = 128
    x2 = jax.random.normal(kx2, (B, T2, D), dtype=jnp.float32)
    out4 = fsmn_conv2d(x2, w_l, w_r, skip_connect=True, max_time_tile=64)
    jax.block_until_ready(out4)
    ref4 = ref_forward(x2, w_l, w_r, skip_connect=True)
    assert out4.shape == (B, T2, D)
    assert jnp.allclose(out4, ref4, **TOL), float(jnp.max(jnp.abs(out4 - ref4)))

    # Case 5: wide channels (Dp >= 256) -> exercises the non-im2col accumulating-dot path.
    D3, L3 = 256, 3
    x3 = jax.random.normal(kx3, (1, T, D3), dtype=jnp.float32)
    w_l3 = jax.random.normal(kwl3, (D3, D3, L3), dtype=jnp.float32) * 0.02
    out5 = fsmn_conv2d(x3, w_l3, None, skip_connect=True)
    jax.block_until_ready(out5)
    ref5 = ref_forward(x3, w_l3, None, skip_connect=True)
    assert out5.shape == (1, T, D3)
    assert jnp.allclose(out5, ref5, **TOL), float(jnp.max(jnp.abs(out5 - ref5)))

    print("KERNEL_OK")
</pallas_src>

<mosaic_0001>
module attributes {stable_mosaic.version = 11 : i64} {
  func.func @_fsmn_kernel(%arg0: i32, %arg1: i32, %arg2: memref<1x16x128xbf16, #tpu.memory_space<vmem>>, %arg3: memref<1x16x128xbf16, #tpu.memory_space<vmem>>, %arg4: memref<512x128xbf16, #tpu.memory_space<vmem>>, %arg5: memref<1x16x128xf32, #tpu.memory_space<vmem>>) attributes {dimension_semantics = [#tpu.dimension_semantics<parallel>, #tpu.dimension_semantics<parallel>], iteration_bounds = array<i64: 2, 1>, scalar_prefetch = 0 : i64, scratch_operands = 0 : i64, tpu.core_type = #tpu.core_type<tc>, window_params = [{transform_indices = @transform_0, window_bounds = array<i64: 1, 16, 128>}, {transform_indices = @transform_1, window_bounds = array<i64: 1, 16, 128>}, {pipeline_mode = #tpu.pipeline_mode<synchronous>, transform_indices = @transform_2, window_bounds = array<i64: 512, 128>}, {transform_indices = @transform_3, window_bounds = array<i64: 1, 16, 128>}]} {
    %c0 = arith.constant 0 : index
    %c0_0 = arith.constant 0 : index
    %c0_1 = arith.constant 0 : index
    %0 = vector.load %arg2[%c0, %c0_0, %c0_1] : memref<1x16x128xbf16, #tpu.memory_space<vmem>>, vector<1x16x128xbf16>
    %1 = vector.shape_cast %0 : vector<1x16x128xbf16> to vector<16x128xbf16>
    %c0_2 = arith.constant 0 : index
    %c0_3 = arith.constant 0 : index
    %c0_4 = arith.constant 0 : index
    %2 = vector.load %arg3[%c0_2, %c0_3, %c0_4] : memref<1x16x128xbf16, #tpu.memory_space<vmem>>, vector<1x16x128xbf16>
    %3 = vector.shape_cast %2 : vector<1x16x128xbf16> to vector<16x128xbf16>
    %4 = tpu.concatenate %1, %3 in 0 : vector<16x128xbf16>, vector<16x128xbf16> -> vector<32x128xbf16>
    %5 = vector.extract_strided_slice %4 {offsets = [0, 0], sizes = [16, 128], strides = [1, 1]} : vector<32x128xbf16> to vector<16x128xbf16>
    %6 = vector.extract_strided_slice %4 {offsets = [1, 0], sizes = [16, 128], strides = [1, 1]} : vector<32x128xbf16> to vector<16x128xbf16>
    %7 = vector.extract_strided_slice %4 {offsets = [2, 0], sizes = [16, 128], strides = [1, 1]} : vector<32x128xbf16> to vector<16x128xbf16>
    %8 = vector.extract_strided_slice %4 {offsets = [3, 0], sizes = [16, 128], strides = [1, 1]} : vector<32x128xbf16> to vector<16x128xbf16>
    %9 = tpu.concatenate %5, %6, %7, %8 in 1 : vector<16x128xbf16>, vector<16x128xbf16>, vector<16x128xbf16>, vector<16x128xbf16> -> vector<16x512xbf16>
    %c0_5 = arith.constant 0 : index
    %c0_6 = arith.constant 0 : index
    %10 = vector.load %arg4[%c0_5, %c0_6] : memref<512x128xbf16, #tpu.memory_space<vmem>>, vector<512x128xbf16>
    %cst = arith.constant dense<0.000000e+00> : vector<16x128xf32>
    %11 = tpu.matmul %9, %10, %cst {dimension_numbers = #tpu.dot_dimension_numbers<[1], [0], [0], [1], [0, 0, 1, 1], [], []>} : vector<16x512xbf16>, vector<512x128xbf16>, vector<16x128xf32> -> vector<16x128xf32>
    %c0_7 = arith.constant 0 : index
    %c0_8 = arith.constant 0 : index
    %c0_9 = arith.constant 0 : index
    %12 = vector.load %arg5[%c0_7, %c0_8, %c0_9] : memref<1x16x128xf32, #tpu.memory_space<vmem>>, vector<1x16x128xf32>
    %13 = vector.shape_cast %12 : vector<1x16x128xf32> to vector<16x128xf32>
    %14 = vector.shape_cast %11 : vector<16x128xf32> to vector<1x16x128xf32>
    tpu.vector_store %arg5[%c0_7, %c0_8, %c0_9], %14 {strides = array<i32>} : memref<1x16x128xf32, #tpu.memory_space<vmem>>, vector<1x16x128xf32>,
    return
  }
  func.func @transform_0(%arg0: i32, %arg1: i32) -> (i32, i32, i32) {
    %c0_i32 = arith.constant 0 : i32
    %c0_i32_0 = arith.constant 0 : i32
    return %arg0, %arg1, %c0_i32 : i32, i32, i32
  }
  func.func @transform_1(%arg0: i32, %arg1: i32) -> (i32, i32, i32) {
    %c1_i32 = arith.constant 1 : i32
    %0 = arith.addi %arg1, %c1_i32 : i32
    %c1_i32_0 = arith.constant 1 : i32
    %1 = arith.muli %0, %c1_i32_0 : i32
    %c0_i32 = arith.constant 0 : i32
    %c0_i32_1 = arith.constant 0 : i32
    return %arg0, %1, %c0_i32 : i32, i32, i32
  }
  func.func @transform_2(%arg0: i32, %arg1: i32) -> (i32, i32) {
    %c0_i32 = arith.constant 0 : i32
    %c0_i32_0 = arith.constant 0 : i32
    %c0_i32_1 = arith.constant 0 : i32
    return %c0_i32, %c0_i32_0 : i32, i32
  }
  func.func @transform_3(%arg0: i32, %arg1: i32) -> (i32, i32, i32) {
    %c0_i32 = arith.constant 0 : i32
    %c0_i32_0 = arith.constant 0 : i32
    return %arg0, %arg1, %c0_i32 : i32, i32, i32
  }
}

</mosaic_0001>

<llo_original>
// kernel: tpu_custom_call.1
$region0: #{tpu_custom_call.1}
  #allocation0 [shape = 'u32[]', space=smem, size = 0x4, offset = 0x4, fixed_abs, tag = 'smem constant byte address 0x4 - core index']
  #allocation1 [shape = 'u32[144,128]{1,0:T(1,128)}', space=vmem, size = 0x12000, scoped, tag = 'internal scratch']
  %s0 = inlined_call_operand.hbm [shape: bf16[2,32,128], index: 0, kind: input, shape index: {}]
  %s1 = inlined_call_operand.hbm [shape: bf16[2,32,128], index: 1, kind: input, shape index: {}]
  %s2 = inlined_call_operand.hbm [shape: bf16[512,128], index: 2, kind: input, shape index: {}]
  %s3 = inlined_call_operand.hbm [shape: f32[2,16,128], index: 3, kind: output, shape index: {}]
  %s4 = sld [smem:[#allocation0]]
  $region57: #{tpu_custom_call.1} parent=0
    _
  %s6 = ssub.s32 1, %s4
  %s7 = scalar_select 0, %s6, %s4
  $region1: #{tpu_custom_call.1} parent=0
    #allocation2 [shape = 'u8[8192]{0}', space=vmem, size = 0x2000, scoped, tag = 'input window, operand 0']
    #allocation3 [shape = 's32[2]{0}', space=sflag, size = 0x8, scoped, tag = 'scoped memory for tpu_custom_call.1']
    #allocation4 [shape = 's32[2]{0}', space=sflag, size = 0x8, scoped, tag = 'scoped memory for tpu_custom_call.1']
    #allocation5 [shape = 'u8[8192]{0}', space=vmem, size = 0x2000, scoped, tag = 'input window, operand 1']
    #allocation6 [shape = 's32[2]{0}', space=sflag, size = 0x8, scoped, tag = 'scoped memory for tpu_custom_call.1']
    #allocation7 [shape = 'u8[131072]{0}', space=vmem, size = 0x20000, scoped, tag = 'input window, operand 2, single buffered']
    #allocation8 [shape = 'u8[16384]{0}', space=vmem, size = 0x4000, scoped, tag = 'output window, operand 0']
    %8 = vsyncpa [#allocation3], 0
    %s9 = scalar_lea.sflag [#allocation3], 1
    %10 = vsyncpa %s9, 0
    %11 = vsyncpa [#allocation6], 0
    %s12 = scalar_lea.sflag [#allocation6], 1
    %13 = vsyncpa %s12, 0
    %14 = vsyncpa [#allocation4], 0
    %s15 = scalar_lea.sflag [#allocation4], 1
    %16 = vsyncpa %s15, 0
    loop: start=0, step=1, limit=4
    $region2: #{tpu_custom_call.1} parent=1 // loop_pre_header
      _
    $region3: #{tpu_custom_call.1} parent=1 // loop_header
      %s18 = sphi 0, %s22
      %p19 = scmp.ge.s32.totalorder %s18, 4
      %s25 = sphi 0, %s37
      %s26 = sphi 0, %s33
      %s27 = sphi 0, %s25
      %s28 = sphi 0, %s26
      %s29 = sphi 0, %s27
      %s30 = sphi 0, %s28
      %s42 = sphi 0, %s44
      %s45 = sphi 0, %s42
      %s46 = sphi 0, %s45
      %s62 = sphi 0, %s46
      %s72 = sphi 0, %s74
      %s75 = sphi 0, %s72
      %s76 = sphi 0, %s75
      %s92 = sphi 0, %s76
      %s96 = sphi 0, %s96
      %s98 = sphi 0, %s96
      %s99 = sphi 0, %s98
      %s113 = sphi 0, %s99
      %s121 = sphi 0, %s123
      %s124 = sphi 0, %s121
      %s125 = sphi 0, %s124
      %s141 = sphi 0, %s125
    $region4: #{tpu_custom_call.1} parent=1 // loop_header_branch
      %21 = sbr.rel (%p19) target = $region8
    $region5: #{tpu_custom_call.1} parent=1 // loop_body
      %s23 = ssub.s32 %s18, 1
      %s24 = ssub.s32 %s18, 2
      %s31 = sadd.s32 1, %s26
      %p32 = scmp.ge.s32.totalorder %s31, 1
      %s33 = scalar_select %p32, 0, %s31
      %s34 = sadd.s32 1, %s25
      %s35 = scalar_select %p32, %s34, %s25
      %p36 = scmp.ge.s32.totalorder %s35, 2
      %s37 = scalar_select %p36, 0, %s35
      %s38 = ssub.s32 %s25, %s37
      %s39 = ssub.s32 %s26, %s33
      %s40 = sor.u32 %s38, %s39
      %p41 = scmp.eq.s32.totalorder %s40, 0
      %s43 = sadd.s32 %s42, 1
      %s44 = scalar_select %p41, %s42, %s43
      %p47 = pneg %p41
      %p48 = scmp.eq.s32.totalorder %s18, 1
      %p49 = por %p47, %p48
      %p50 = scmp.ne.s32.totalorder %s42, %s45
      %p51 = scmp.eq.s32.totalorder %s18, 0
      %p52 = por %p50, %p51
      %p53 = scmp.ne.s32.totalorder %s42, %s45
      %p54 = scmp.eq.s32.totalorder %s23, 1
      %p55 = por %p53, %p54
      %p56 = scmp.ne.s32.totalorder %s45, %s46
      %p57 = scmp.eq.s32.totalorder %s23, 0
      %p58 = por %p56, %p57
      %p59 = scmp.ne.s32.totalorder %s45, %s46
      %p60 = scmp.eq.s32.totalorder %s24, 1
      %p61 = por %p59, %p60
      %p63 = scmp.ne.s32.totalorder %s46, %s62
      %p64 = scmp.eq.s32.totalorder %s24, 0
      %p65 = por %p63, %p64
      %s66 = sadd.s32 %s26, 1
      %s67 = sadd.s32 %s33, 1
      %s68 = ssub.s32 %s25, %s37
      %s69 = ssub.s32 %s66, %s67
      %s70 = sor.u32 %s68, %s69
      %p71 = scmp.eq.s32.totalorder %s70, 0
      %s73 = sadd.s32 %s72, 1
      %s74 = scalar_select %p71, %s72, %s73
      %p77 = pneg %p71
      %p78 = scmp.eq.s32.totalorder %s18, 1
      %p79 = por %p77, %p78
      %p80 = scmp.ne.s32.totalorder %s72, %s75
      %p81 = scmp.eq.s32.totalorder %s18, 0
      %p82 = por %p80, %p81
      %p83 = scmp.ne.s32.totalorder %s72, %s75
      %p84 = scmp.eq.s32.totalorder %s23, 1
      %p85 = por %p83, %p84
      %p86 = scmp.ne.s32.totalorder %s75, %s76
      %p87 = scmp.eq.s32.totalorder %s23, 0
      %p88 = por %p86, %p87
      %p89 = scmp.ne.s32.totalorder %s75, %s76
      %p90 = scmp.eq.s32.totalorder %s24, 1
      %p91 = por %p89, %p90
      %p93 = scmp.ne.s32.totalorder %s76, %s92
      %p94 = scmp.eq.s32.totalorder %s24, 0
      %p95 = por %p93, %p94
      %s97 = sadd.s32 %s96, 1
      %p100 = scmp.eq.s32.totalorder %s18, 1
      %p101 = scmp.ne.s32.totalorder %s96, %s98
      %p102 = scmp.eq.s32.totalorder %s18, 0
      %p103 = por %p101, %p102
      %p104 = scmp.ne.s32.totalorder %s96, %s98
      %p105 = scmp.eq.s32.totalorder %s23, 1
      %p106 = por %p104, %p105
      %p107 = scmp.ne.s32.totalorder %s98, %s99
      %p108 = scmp.eq.s32.totalorder %s23, 0
      %p109 = por %p107, %p108
      %p110 = scmp.ne.s32.totalorder %s98, %s99
      %p111 = scmp.eq.s32.totalorder %s24, 1
      %p112 = por %p110, %p111
      %p114 = scmp.ne.s32.totalorder %s99, %s113
      %p115 = scmp.eq.s32.totalorder %s24, 0
      %p116 = por %p114, %p115
      %s117 = ssub.s32 %s25, %s37
      %s118 = ssub.s32 %s26, %s33
      %s119 = sor.u32 %s117, %s118
      %p120 = scmp.eq.s32.totalorder %s119, 0
      %s122 = sadd.s32 %s121, 1
      %s123 = scalar_select %p120, %s121, %s122
      %p126 = pneg %p120
      %p127 = scmp.eq.s32.totalorder %s18, 1
      %p128 = por %p126, %p127
      %p129 = scmp.ne.s32.totalorder %s121, %s124
      %p130 = scmp.eq.s32.totalorder %s18, 0
      %p131 = por %p129, %p130
      %p132 = scmp.ne.s32.totalorder %s121, %s124
      %p133 = scmp.eq.s32.totalorder %s23, 1
      %p134 = por %p132, %p133
      %p135 = scmp.ne.s32.totalorder %s124, %s125
      %p136 = scmp.eq.s32.totalorder %s23, 0
      %p137 = por %p135, %p136
      %p138 = scmp.ne.s32.totalorder %s124, %s125
      %p139 = scmp.eq.s32.totalorder %s24, 1
      %p140 = por %p138, %p139
      %p142 = scmp.ne.s32.totalorder %s125, %s141
      %p143 = scmp.eq.s32.totalorder %s24, 0
      %p144 = por %p142, %p143
      %p145 = scmp.le.s32.totalorder 1, %s18
      %p146 = scmp.lt.s32.totalorder %s18, 3
      %p147 = pnand %p145, %p146
      %p148 = pneg %p147
      // Predicated region
      $region9: #{tpu_custom_call.1} parent=5 // pred_check
        _
      $region10: #{tpu_custom_call.1} parent=5 // pred_check_branch
        %150 = sbr.rel (%p147) target = $region12
      $region11: #{tpu_custom_call.1} parent=5 // pred_region
        %s151 = ssub.s32 %s18, 1
        // Predicated region
        $region13: #{tpu_custom_call.1} parent=11 // pred_check
          %p152 = pneg %p109
        $region14: #{tpu_custom_call.1} parent=11 // pred_check_branch
          %154 = sbr.rel (%p152) target = $region16
        $region15: #{tpu_custom_call.1} parent=11 // pred_region
          %s156 = ssub.s32 4096, 4096
          %157 = vsyncadd [#allocation6], %s156
          %s158 = sshll.u32 [#allocation7], 4
          %s159 = int_to_ptr.vmem [resolvable:$true] %s158
          %164 = dma.hbm_to_vmem [thread:$0]  %s2, 4096, %s159, [#allocation6], 64, 64, 4
        $region16: #{tpu_custom_call.1} parent=11 // pred_fallthru
          _
      $region12: #{tpu_custom_call.1} parent=5 // pred_fallthru
        _
      %p165 = scmp.lt.s32.totalorder %s18, 2
      // Predicated region
      $region17: #{tpu_custom_call.1} parent=5 // pred_check
        %p166 = pneg %p165
      $region18: #{tpu_custom_call.1} parent=5 // pred_check_branch
        %168 = sbr.rel (%p166) target = $region20
      $region19: #{tpu_custom_call.1} parent=5 // pred_region
        // Predicated region
        $region21: #{tpu_custom_call.1} parent=19 // pred_check
          %p169 = pneg %p52
        $region22: #{tpu_custom_call.1} parent=19 // pred_check_branch
          %171 = sbr.rel (%p169) target = $region24
        $region23: #{tpu_custom_call.1} parent=19 // pred_region
          %s172 = sand.u32 %s42, 1
          %s173 = scalar_lea.sflag [#allocation3], %s172
          %s174 = sand.u32 %s42, 1
          %s175 = smul.addr %s174, 8
          %s176 = scalar_lea.vmem [#allocation2], %s175
          %s177 = smul.u32 2, %s26
          %s179 = ssub.s32 128, 128
          %180 = vsyncadd %s173, %s179
          %s181 = smul.addr %s25, 4
          %s182 = sadd.s32 %s177, %s181
          %s183 = smul.addr %s182, 64
          %s184 = scalar_lea.hbm %s0, %s183
          %s185 = sshll.u32 %s176, 4
          %s186 = int_to_ptr.vmem [resolvable:$true] %s185
          %191 = dma.hbm_to_vmem [thread:$0]  %s184, 128, %s186, %s173, 64, 64, 4
        $region24: #{tpu_custom_call.1} parent=19 // pred_fallthru
          _
        // Predicated region
        $region25: #{tpu_custom_call.1} parent=19 // pred_check
          %p192 = pneg %p82
        $region26: #{tpu_custom_call.1} parent=19 // pred_check_branch
          %194 = sbr.rel (%p192) target = $region28
        $region27: #{tpu_custom_call.1} parent=19 // pred_region
          %s195 = sand.u32 %s18, 1
          %s196 = scalar_lea.sflag [#allocation6], %s195
          %s197 = sand.u32 %s72, 1
          %s198 = smul.addr %s197, 8
          %s199 = scalar_lea.vmem [#allocation5], %s198
          %s200 = sadd.s32 %s26, 1
          %s201 = smul.u32 2, %s200
          %s203 = ssub.s32 128, 128
          %204 = vsyncadd %s196, %s203
          %s205 = smul.addr %s25, 4
          %s206 = sadd.s32 %s201, %s205
          %s207 = smul.addr %s206, 64
          %s208 = scalar_lea.hbm %s1, %s207
          %s209 = sshll.u32 %s199, 4
          %s210 = int_to_ptr.vmem [resolvable:$true] %s209
          %215 = dma.hbm_to_vmem [thread:$0]  %s208, 128, %s210, %s196, 64, 64, 4
        $region28: #{tpu_custom_call.1} parent=19 // pred_fallthru
          _
      $region20: #{tpu_custom_call.1} parent=5 // pred_fallthru
        _
      %p216 = scmp.le.s32.totalorder 1, %s18
      %p217 = scmp.lt.s32.totalorder %s18, 3
      %p218 = pnand %p216, %p217
      %p219 = pneg %p218
      // Predicated region
      $region29: #{tpu_custom_call.1} parent=5 // pred_check
        _
      $region30: #{tpu_custom_call.1} parent=5 // pred_check_branch
        %221 = sbr.rel (%p218) target = $region32
      $region31: #{tpu_custom_call.1} parent=5 // pred_region
        %s222 = ssub.s32 %s18, 1
        %s223 = sand.u32 %s45, 1
        %s224 = scalar_lea.sflag [#allocation3], %s223
        %s225 = sand.u32 %s45, 1
        %s226 = smul.addr %s225, 8
        %s227 = scalar_lea.vmem [#allocation2], %s226
        // Predicated region
        $region33: #{tpu_custom_call.1} parent=31 // pred_check
          %p228 = pneg %p58
        $region34: #{tpu_custom_call.1} parent=31 // pred_check_branch
          %230 = sbr.rel (%p228) target = $region36
        $region35: #{tpu_custom_call.1} parent=31 // pred_region
          %231 = dma.done %s224, 128
        $region36: #{tpu_custom_call.1} parent=31 // pred_fallthru
          _
        %s232 = sand.u32 %s23, 1
        %s233 = scalar_lea.sflag [#allocation6], %s232
        %s234 = sand.u32 %s75, 1
        %s235 = smul.addr %s234, 8
        %s236 = scalar_lea.vmem [#allocation5], %s235
        // Predicated region
        $region37: #{tpu_custom_call.1} parent=31 // pred_check
          %p237 = pneg %p88
        $region38: #{tpu_custom_call.1} parent=31 // pred_check_branch
          %239 = sbr.rel (%p237) target = $region40
        $region39: #{tpu_custom_call.1} parent=31 // pred_region
          %240 = dma.done %s233, 128
        $region40: #{tpu_custom_call.1} parent=31 // pred_fallthru
          _
        // Predicated region
        $region41: #{tpu_custom_call.1} parent=31 // pred_check
          %p241 = pneg %p109
        $region42: #{tpu_custom_call.1} parent=31 // pred_check_branch
          %243 = sbr.rel (%p241) target = $region44
        $region43: #{tpu_custom_call.1} parent=31 // pred_region
          %244 = dma.done [#allocation6], 4096
        $region44: #{tpu_custom_call.1} parent=31 // pred_fallthru
          _
        %s245 = sand.u32 %s45, 1
        %s246 = scalar_lea.sflag [#allocation3], %s245
        %s247 = sand.u32 %s45, 1
        %s248 = smul.addr %s247, 8
        %s249 = scalar_lea.vmem [#allocation2], %s248
        %p250 = pneg %p58
        %p251 = pneg %p55
        %s252 = sand.u32 %s23, 1
        %s253 = scalar_lea.sflag [#allocation6], %s252
        %s254 = sand.u32 %s75, 1
        %s255 = smul.addr %s254, 8
        %s256 = scalar_lea.vmem [#allocation5], %s255
        %p257 = pneg %p88
        %p258 = pneg %p85
        %p259 = pneg %p109
        %p260 = pneg %p106
        %p261 = pneg %p137
        %p262 = pneg %p134
        %s263 = sand.u32 %s124, 1
        %s264 = scalar_lea.sflag [#allocation4], %s263
        %s265 = sand.u32 %s124, 1
        %s266 = smul.addr %s265, 16
        %s267 = scalar_lea.vmem [#allocation8], %s266
        %s268 = smul.u32 2, %s28
        %s269 = sadd.s32 %s28, 1
        %s270 = smul.u32 2, %s269
        %s271 = smul.u32 2, %s28
        %v273 = vld [vmem:[%s227] sm:$0xf]
        %v274 = vld [vmem:[%s227 + $0x4] sm:$0xf]
        %v275 = vld [vmem:[%s236] sm:$0xf]
        %v276 = vld [vmem:[%s236 + $0x4] sm:$0xf]
        %v279 = vunpack.c.l.b16 %v273
        %v280 = vunpack.c.l.b16 %v274
        %v281 = vpack.c.b16 %v280, %v279
        %v285 = vunpack.c.l.b16 %v275
        %v286 = vunpack.c.l.b16 %v276
        %v287 = vpack.c.b16 %v286, %v285
        %vm288 = vsmask.f32 7424
        %v290 = vshrl.u32 %v281, 16
        %v292 = vshll.u32 %v281, 16
        %v294 = vrot.slane %v292, 1
        %v295 = vor.u32 %v290, %v294
        %v297 = vshll.u32 %v287, 16
        %v299 = vrot.slane %v297, 1
        %v300 = vsel %vm288, %v295, %v299
        %vm302 = vcmask 1046528
        %v303 = vrot.slane %v281, 1
        %v304 = vrot.slane %v287, 1
        %v305 = vsel %vm302, %v303, %v304
        %vm307 = vsmask.f32 6400
        %v308 = vrot.slane %v290, 1
        %v309 = vrot.slane %v292, 2
        %v310 = vor.u32 %v308, %v309
        %v311 = vshrl.u32 %v287, 16
        %v313 = vrot.slane %v311, 1
        %v314 = vrot.slane %v297, 2
        %v315 = vor.u32 %v313, %v314
        %v316 = vsel %vm307, %v310, %v315
        %v318 = vld [vmem:[#allocation7] sm:$0xf]
        %v319 = vld [vmem:[#allocation7 + $0x4] sm:$0xf]
        %v320 = vld [vmem:[#allocation7 + $0x8] sm:$0xf]
        %v321 = vld [vmem:[#allocation7 + $0xc] sm:$0xf]
        %v322 = vld [vmem:[#allocation7 + $0x10] sm:$0xf]
        %v323 = vld [vmem:[#allocation7 + $0x14] sm:$0xf]
        %v324 = vld [vmem:[#allocation7 + $0x18] sm:$0xf]
        %v325 = vld [vmem:[#allocation7 + $0x1c] sm:$0xf]
        %v326 = vld [vmem:[#allocation7 + $0x20] sm:$0xf]
        %v327 = vld [vmem:[#allocation7 + $0x24] sm:$0xf]
        %v328 = vld [vmem:[#allocation7 + $0x28] sm:$0xf]
        %v329 = vld [vmem:[#allocation7 + $0x2c] sm:$0xf]
        %v330 = vld [vmem:[#allocation7 + $0x30] sm:$0xf]
        %v331 = vld [vmem:[#allocation7 + $0x34] sm:$0xf]
        %v332 = vld [vmem:[#allocation7 + $0x38] sm:$0xf]
        %v333 = vld [vmem:[#allocation7 + $0x3c] sm:$0xf]
        %v334 = vld [vmem:[#allocation7 + $0x40] sm:$0xf]
        %v335 = vld [vmem:[#allocation7 + $0x44] sm:$0xf]
        %v336 = vld [vmem:[#allocation7 + $0x48] sm:$0xf]
        %v337 = vld [vmem:[#allocation7 + $0x4c] sm:$0xf]
        %v338 = vld [vmem:[#allocation7 + $0x50] sm:$0xf]
        %v339 = vld [vmem:[#allocation7 + $0x54] sm:$0xf]
        %v340 = vld [vmem:[#allocation7 + $0x58] sm:$0xf]
        %v341 = vld [vmem:[#allocation7 + $0x5c] sm:$0xf]
        %v342 = vld [vmem:[#allocation7 + $0x60] sm:$0xf]
        %v343 = vld [vmem:[#allocation7 + $0x64] sm:$0xf]
        %v344 = vld [vmem:[#allocation7 + $0x68] sm:$0xf]
        %v345 = vld [vmem:[#allocation7 + $0x6c] sm:$0xf]
        %v346 = vld [vmem:[#allocation7 + $0x70] sm:$0xf]
        %v347 = vld [vmem:[#allocation7 + $0x74] sm:$0xf]
        %v348 = vld [vmem:[#allocation7 + $0x78] sm:$0xf]
        %v349 = vld [vmem:[#allocation7 + $0x7c] sm:$0xf]
        %v350 = vld [vmem:[#allocation7 + $0x80] sm:$0xf]
        %v351 = vld [vmem:[#allocation7 + $0x84] sm:$0xf]
        %v352 = vld [vmem:[#allocation7 + $0x88] sm:$0xf]
        %v353 = vld [vmem:[#allocation7 + $0x8c] sm:$0xf]
        %v354 = vld [vmem:[#allocation7 + $0x90] sm:$0xf]
        %v355 = vld [vmem:[#allocation7 + $0x94] sm:$0xf]
        %v356 = vld [vmem:[#allocation7 + $0x98] sm:$0xf]
        %v357 = vld [vmem:[#allocation7 + $0x9c] sm:$0xf]
        %v358 = vld [vmem:[#allocation7 + $0xa0] sm:$0xf]
        %v359 = vld [vmem:[#allocation7 + $0xa4] sm:$0xf]
        %v360 = vld [vmem:[#allocation7 + $0xa8] sm:$0xf]
        %v361 = vld [vmem:[#allocation7 + $0xac] sm:$0xf]
        %v362 = vld [vmem:[#allocation7 + $0xb0] sm:$0xf]
        %v363 = vld [vmem:[#allocation7 + $0xb4] sm:$0xf]
        %v364 = vld [vmem:[#allocation7 + $0xb8] sm:$0xf]
        %v365 = vld [vmem:[#allocation7 + $0xbc] sm:$0xf]
        %v366 = vld [vmem:[#allocation7 + $0xc0] sm:$0xf]
        %v367 = vld [vmem:[#allocation7 + $0xc4] sm:$0xf]
        %v368 = vld [vmem:[#allocation7 + $0xc8] sm:$0xf]
        %v369 = vld [vmem:[#allocation7 + $0xcc] sm:$0xf]
        %v370 = vld [vmem:[#allocation7 + $0xd0] sm:$0xf]
        %v371 = vld [vmem:[#allocation7 + $0xd4] sm:$0xf]
        %v372 = vld [vmem:[#allocation7 + $0xd8] sm:$0xf]
        %v373 = vld [vmem:[#allocation7 + $0xdc] sm:$0xf]
        %v374 = vld [vmem:[#allocation7 + $0xe0] sm:$0xf]
        %v375 = vld [vmem:[#allocation7 + $0xe4] sm:$0xf]
        %v376 = vld [vmem:[#allocation7 + $0xe8] sm:$0xf]
        %v377 = vld [vmem:[#allocation7 + $0xec] sm:$0xf]
        %v378 = vld [vmem:[#allocation7 + $0xf0] sm:$0xf]
        %v379 = vld [vmem:[#allocation7 + $0xf4] sm:$0xf]
        %v380 = vld [vmem:[#allocation7 + $0xf8] sm:$0xf]
        %v381 = vld [vmem:[#allocation7 + $0xfc] sm:$0xf]
        %v446 = vunpack.c.l.b16 %v318
        %v447 = vunpack.c.l.b16 %v319
        %v448 = vunpack.c.l.b16 %v320
        %v449 = vunpack.c.l.b16 %v321
        %v450 = vunpack.c.l.b16 %v322
        %v451 = vunpack.c.l.b16 %v323
        %v452 = vunpack.c.l.b16 %v324
        %v453 = vunpack.c.l.b16 %v325
        %v454 = vunpack.c.l.b16 %v326
        %v455 = vunpack.c.l.b16 %v327
        %v456 = vunpack.c.l.b16 %v328
        %v457 = vunpack.c.l.b16 %v329
        %v458 = vunpack.c.l.b16 %v330
        %v459 = vunpack.c.l.b16 %v331
        %v460 = vunpack.c.l.b16 %v332
        %v461 = vunpack.c.l.b16 %v333
        %v462 = vunpack.c.l.b16 %v334
        %v463 = vunpack.c.l.b16 %v335
        %v464 = vunpack.c.l.b16 %v336
        %v465 = vunpack.c.l.b16 %v337
        %v466 = vunpack.c.l.b16 %v338
        %v467 = vunpack.c.l.b16 %v339
        %v468 = vunpack.c.l.b16 %v340
        %v469 = vunpack.c.l.b16 %v341
        %v470 = vunpack.c.l.b16 %v342
        %v471 = vunpack.c.l.b16 %v343
        %v472 = vunpack.c.l.b16 %v344
        %v473 = vunpack.c.l.b16 %v345
        %v474 = vunpack.c.l.b16 %v346
        %v475 = vunpack.c.l.b16 %v347
        %v476 = vunpack.c.l.b16 %v348
        %v477 = vunpack.c.l.b16 %v349
        %v478 = vunpack.c.l.b16 %v350
        %v479 = vunpack.c.l.b16 %v351
        %v480 = vunpack.c.l.b16 %v352
        %v481 = vunpack.c.l.b16 %v353
        %v482 = vunpack.c.l.b16 %v354
        %v483 = vunpack.c.l.b16 %v355
        %v484 = vunpack.c.l.b16 %v356
        %v485 = vunpack.c.l.b16 %v357
        %v486 = vunpack.c.l.b16 %v358
        %v487 = vunpack.c.l.b16 %v359
        %v488 = vunpack.c.l.b16 %v360
        %v489 = vunpack.c.l.b16 %v361
        %v490 = vunpack.c.l.b16 %v362
        %v491 = vunpack.c.l.b16 %v363
        %v492 = vunpack.c.l.b16 %v364
        %v493 = vunpack.c.l.b16 %v365
        %v494 = vunpack.c.l.b16 %v366
        %v495 = vunpack.c.l.b16 %v367
        %v496 = vunpack.c.l.b16 %v368
        %v497 = vunpack.c.l.b16 %v369
        %v498 = vunpack.c.l.b16 %v370
        %v499 = vunpack.c.l.b16 %v371
        %v500 = vunpack.c.l.b16 %v372
        %v501 = vunpack.c.l.b16 %v373
        %v502 = vunpack.c.l.b16 %v374
        %v503 = vunpack.c.l.b16 %v375
        %v504 = vunpack.c.l.b16 %v376
        %v505 = vunpack.c.l.b16 %v377
        %v506 = vunpack.c.l.b16 %v378
        %v507 = vunpack.c.l.b16 %v379
        %v508 = vunpack.c.l.b16 %v380
        %v509 = vunpack.c.l.b16 %v381
        %v510 = vpack.c.b16 %v447, %v446
        %v511 = vpack.c.b16 %v449, %v448
        %v512 = vpack.c.b16 %v451, %v450
        %v513 = vpack.c.b16 %v453, %v452
        %v514 = vpack.c.b16 %v455, %v454
        %v515 = vpack.c.b16 %v457, %v456
        %v516 = vpack.c.b16 %v459, %v458
        %v517 = vpack.c.b16 %v461, %v460
        %v518 = vpack.c.b16 %v463, %v462
        %v519 = vpack.c.b16 %v465, %v464
        %v520 = vpack.c.b16 %v467, %v466
        %v521 = vpack.c.b16 %v469, %v468
        %v522 = vpack.c.b16 %v471, %v470
        %v523 = vpack.c.b16 %v473, %v472
        %v524 = vpack.c.b16 %v475, %v474
        %v525 = vpack.c.b16 %v477, %v476
        %v526 = vpack.c.b16 %v479, %v478
        %v527 = vpack.c.b16 %v481, %v480
        %v528 = vpack.c.b16 %v483, %v482
        %v529 = vpack.c.b16 %v485, %v484
        %v530 = vpack.c.b16 %v487, %v486
        %v531 = vpack.c.b16 %v489, %v488
        %v532 = vpack.c.b16 %v491, %v490
        %v533 = vpack.c.b16 %v493, %v492
        %v534 = vpack.c.b16 %v495, %v494
        %v535 = vpack.c.b16 %v497, %v496
        %v536 = vpack.c.b16 %v499, %v498
        %v537 = vpack.c.b16 %v501, %v500
        %v538 = vpack.c.b16 %v503, %v502
        %v539 = vpack.c.b16 %v505, %v504
        %v540 = vpack.c.b16 %v507, %v506
        %v541 = vpack.c.b16 %v509, %v508
        %574 = vmatprep.subr.bf16.mxu0 0
        %575 = vmatpush1.bf16.msra.mxu0 %v517
        %576 = vmatprep.subr.bf16.mxu0 0
        %577 = vmatpush1.bf16.msra.mxu0 %v516
        %578 = vmatprep.subr.bf16.mxu0 0
        %579 = vmatpush1.bf16.msra.mxu0 %v515
        %580 = vmatprep.subr.bf16.mxu0 0
        %581 = vmatpush1.bf16.msra.mxu0 %v514
        %582 = vmatprep.subr.bf16.mxu0 0
        %583 = vmatpush1.bf16.msra.mxu0 %v513
        %584 = vmatprep.subr.bf16.mxu0 0
        %585 = vmatpush1.bf16.msra.mxu0 %v512
        %586 = vmatprep.subr.bf16.mxu0 0
        %587 = vmatpush1.bf16.msra.mxu0 %v511
        %588 = vmatprep.subr.bf16.mxu0 0
        %589 = vmatpush1.bf16.msra.mxu0 %v510
        %590 = vmatprep.subr.bf16.mxu0 0
        %591 = vmatpush2.bf16.msra.mxu0 %v525
        %592 = vmatprep.subr.bf16.mxu0 0
        %593 = vmatpush2.bf16.msra.mxu0 %v524
        %594 = vmatprep.subr.bf16.mxu0 0
        %595 = vmatpush2.bf16.msra.mxu0 %v523
        %596 = vmatprep.subr.bf16.mxu0 0
        %597 = vmatpush2.bf16.msra.mxu0 %v522
        %598 = vmatprep.subr.bf16.mxu0 0
        %599 = vmatpush2.bf16.msra.mxu0 %v521
        %600 = vmatprep.subr.bf16.mxu0 0
        %601 = vmatpush2.bf16.msra.mxu0 %v520
        %602 = vmatprep.subr.bf16.mxu0 0
        %603 = vmatpush2.bf16.msra.mxu0 %v519
        %604 = vmatprep.subr.bf16.mxu0 0
        %605 = vmatpush2.bf16.msra.mxu0 %v518
        %606 = vmatprep.mubr.bf16.mxu0 %v300
        %607 = vmatmul.mubr.bf16.gmra.mxu0 %v281
        %v608 = vpop.f32.mrf.mxu0
        %v609 = vadd.f32 0.0, %v608
        %v610 = vpop.f32.mrf.mxu0
        %v611 = vpop.f32.mrf.mxu0
        %v612 = vadd.f32 0.0, %v611
        %v613 = vpop.f32.mrf.mxu0
        %614 = vdwg.mxu0
        %615 = vmatprep.subr.bf16.mxu0 0
        %616 = vmatpush1.bf16.msra.mxu0 %v533
        %617 = vmatprep.subr.bf16.mxu0 0
        %618 = vmatpush1.bf16.msra.mxu0 %v532
        %619 = vmatprep.subr.bf16.mxu0 0
        %620 = vmatpush1.bf16.msra.mxu0 %v531
        %621 = vmatprep.subr.bf16.mxu0 0
        %622 = vmatpush1.bf16.msra.mxu0 %v530
        %623 = vmatprep.subr.bf16.mxu0 0
        %624 = vmatpush1.bf16.msra.mxu0 %v529
        %625 = vmatprep.subr.bf16.mxu0 0
        %626 = vmatpush1.bf16.msra.mxu0 %v528
        %627 = vmatprep.subr.bf16.mxu0 0
        %628 = vmatpush1.bf16.msra.mxu0 %v527
        %629 = vmatprep.subr.bf16.mxu0 0
        %630 = vmatpush1.bf16.msra.mxu0 %v526
        %631 = vmatprep.subr.bf16.mxu0 0
        %632 = vmatpush2.bf16.msra.mxu0 %v541
        %633 = vmatprep.subr.bf16.mxu0 0
        %634 = vmatpush2.bf16.msra.mxu0 %v540
        %635 = vmatprep.subr.bf16.mxu0 0
        %636 = vmatpush2.bf16.msra.mxu0 %v539
        %637 = vmatprep.subr.bf16.mxu0 0
        %638 = vmatpush2.bf16.msra.mxu0 %v538
        %639 = vmatprep.subr.bf16.mxu0 0
        %640 = vmatpush2.bf16.msra.mxu0 %v537
        %641 = vmatprep.subr.bf16.mxu0 0
        %642 = vmatpush2.bf16.msra.mxu0 %v536
        %643 = vmatprep.subr.bf16.mxu0 0
        %644 = vmatpush2.bf16.msra.mxu0 %v535
        %645 = vmatprep.subr.bf16.mxu0 0
        %646 = vmatpush2.bf16.msra.mxu0 %v534
        %647 = vmatprep.mubr.bf16.mxu0 %v316
        %648 = vmatmul.mubr.bf16.gmra.mxu0 %v305
        %v649 = vpop.f32.mrf.mxu0
        %v650 = vadd.f32 %v609, %v649
        %v651 = vpop.f32.mrf.mxu0
        %v652 = vpop.f32.mrf.mxu0
        %v653 = vadd.f32 %v612, %v652
        %v654 = vpop.f32.mrf.mxu0
        %655 = vdwg.mxu0
        %656 = vst [vmem:[%s267] sm:$0xff] %v650
        %657 = vst [vmem:[%s267 + $0x8] sm:$0xff] %v653
        %s658 = sand.u32 %s124, 1
        %s659 = scalar_lea.sflag [#allocation4], %s658
        %s660 = sand.u32 %s124, 1
        %s661 = smul.addr %s660, 16
        %s662 = scalar_lea.vmem [#allocation8], %s661
        // Predicated region
        $region45: #{tpu_custom_call.1} parent=31 // pred_check
          %p663 = pneg %p134
        $region46: #{tpu_custom_call.1} parent=31 // pred_check_branch
          %665 = sbr.rel (%p663) target = $region48
        $region47: #{tpu_custom_call.1} parent=31 // pred_region
          %s666 = smul.u32 2, %s28
          %s668 = ssub.s32 256, 256
          %669 = vsyncadd %s659, %s668
          %s670 = smul.addr %s27, 2
          %s671 = sadd.s32 %s666, %s670
          %s672 = smul.addr %s671, 128
          %s673 = scalar_lea.hbm %s3, %s672
          %s674 = sshll.u32 %s662, 4
          %s675 = int_to_ptr.vmem [resolvable:$true] %s674
          %680 = dma.vmem_to_hbm [thread:$0]  %s675, 256, %s673, %s659, 128, 128, 8
        $region48: #{tpu_custom_call.1} parent=31 // pred_fallthru
          _
      $region32: #{tpu_custom_call.1} parent=5 // pred_fallthru
        _
      %p681 = scmp.le.s32.totalorder 2, %s18
      // Predicated region
      $region49: #{tpu_custom_call.1} parent=5 // pred_check
        %p682 = pneg %p681
      $region50: #{tpu_custom_call.1} parent=5 // pred_check_branch
        %684 = sbr.rel (%p682) target = $region52
      $region51: #{tpu_custom_call.1} parent=5 // pred_region
        %s685 = ssub.s32 %s18, 2
        // Predicated region
        $region53: #{tpu_custom_call.1} parent=51 // pred_check
          %p686 = pneg %p140
        $region54: #{tpu_custom_call.1} parent=51 // pred_check_branch
          %688 = sbr.rel (%p686) target = $region56
        $region55: #{tpu_custom_call.1} parent=51 // pred_region
          %s689 = sand.u32 %s125, 1
          %s690 = scalar_lea.sflag [#allocation4], %s689
          %s691 = sand.u32 %s125, 1
          %s692 = smul.addr %s691, 16
          %s693 = scalar_lea.vmem [#allocation8], %s692
          %694 = dma.done %s690, 256
        $region56: #{tpu_custom_call.1} parent=51 // pred_fallthru
          _
      $region52: #{tpu_custom_call.1} parent=5 // pred_fallthru
        _
    $region6: #{tpu_custom_call.1} parent=1 // loop_footer
      %s22 = sadd.s32 1, %s18
    $region7: #{tpu_custom_call.1} parent=1 // loop_footer_branch
      %17 = sbr.rel target = $region3
    $region8: #{tpu_custom_call.1} parent=1 // loop_exit
      _
    %695 = vsyncpa [#allocation3], 1
    %s696 = scalar_lea.sflag [#allocation3], 1
    %697 = vsyncpa %s696, 1
    %698 = vsyncpa [#allocation6], 1
    %s699 = scalar_lea.sflag [#allocation6], 1
    %700 = vsyncpa %s699, 1
    %701 = vsyncpa [#allocation4], 1
    %s702 = scalar_lea.sflag [#allocation4], 1
    %703 = vsyncpa %s702, 1

</llo_original>
